<compile_context>
chip_gen: v5e
topology: v5e:2x2
jax: 0.10.0
libtpu: 0.0.40
codegen_flags: <defaults>
</compile_context>

<pallas_src>
import jax
import jax.numpy as jnp
from jax.experimental import pallas as pl
from jax.experimental.pallas import tpu as pltpu

_C1 = 0.01 ** 2
_C2 = 0.03 ** 2
_C1_81 = 81.0 * _C1     # constants pre-scaled by 9^2 (pool normalization folded in)
_C2_81 = 81.0 * _C2

_VMEM_LIMIT_DEFAULT = 48 * 1024 * 1024   # safe on v5e/v6e (128 MiB phys) and v7x (64 MiB phys)
_VMEM_FRACTION = 0.6                     # target footprint fraction of the scoped limit


def _reflect_sum3(a, axis):
    """a[i-1] + a[i] + a[i+1] along `axis` with reflection (i=-1 -> 1, i=L -> L-2).

    One separable factor of an (un-normalized) 3x3 sum over a
    ReflectionPad2d((1,1,1,1)) input.  a: [B, H, W], axis in {1, 2}.
    """
    if axis == 1:
        prev = jnp.concatenate([a[:, 1:2, :], a[:, :-1, :]], axis=1)
        nxt = jnp.concatenate([a[:, 1:, :], a[:, -2:-1, :]], axis=1)
    else:
        prev = jnp.concatenate([a[:, :, 1:2], a[:, :, :-1]], axis=2)
        nxt = jnp.concatenate([a[:, :, 1:], a[:, :, -2:-1]], axis=2)
    return prev + a + nxt


def _sum3x3_reflect(a):
    """Un-normalized 3x3 sum over a reflection-padded (pad=1) image, per [B,H,W]."""
    return _reflect_sum3(_reflect_sum3(a, axis=1), axis=2)


def _ssim_tile_kernel(x_ref, y_ref, out_ref):
    """One N*C tile: compute sum of clipped SSIM loss terms, write it as a
    broadcast scalar into this tile's (1, 8, 128) output block."""
    x = x_ref[...].astype(jnp.float32)
    y = y_ref[...].astype(jnp.float32)

    # 4 pools instead of 5: sigma_x + sigma_y only ever appears summed.
    sx = _sum3x3_reflect(x)            # 9 * mu_x
    sy = _sum3x3_reflect(y)            # 9 * mu_y
    sxy = _sum3x3_reflect(x * y)       # 9 * E[xy]
    sqq = _sum3x3_reflect(x * x + y * y)  # 9 * (E[x^2] + E[y^2])

    mxy = sx * sy                      # 81 * mu_x * mu_y
    mxx_yy = sx * sx + sy * sy         # 81 * (mu_x^2 + mu_y^2)

    # Both factors scaled by 81; the 81^2 cancels in the ratio.
    ssim_n = (2.0 * mxy + _C1_81) * (18.0 * sxy - 2.0 * mxy + _C2_81)
    ssim_d = (mxx_yy + _C1_81) * (9.0 * sqq - mxx_yy + _C2_81)

    # EUP reciprocal (free bundle slot) + one Newton step instead of a VALU divide.
    r = pl.reciprocal(ssim_d, approx=True)
    r = r * (2.0 - ssim_d * r)

    val = jnp.clip((1.0 - ssim_n * r + 1e-20) * 0.5, 0.0, 1.0)

    # Per-tile partial sum, broadcast over a lane-dense (8,128) block so the
    # output store is a plain aligned vst and the grid axis can be "parallel"
    # (v7x megacore: each TensorCore writes only its own tiles' blocks).
    tile_sum = jnp.sum(val)
    out_ref[...] = jnp.full(out_ref.shape, tile_sum, dtype=jnp.float32)


def _tile_footprint_bytes(tile_b, h, w, itemsize):
    """Approximate VMEM footprint of one grid step.

    2 input streams x 2 pipeline buffers of the raw dtype, plus ~10 live
    full-tile f32 temporaries materialized by the body (casts, 4 pooled sums,
    products, ssim_n/d, val)."""
    hw = h * w
    inputs = 2 * 2 * tile_b * hw * itemsize
    temps = 10 * tile_b * hw * 4
    return inputs + temps


def _pick_tile_b(nc, h, w, itemsize, budget_bytes):
    """Largest divisor of nc whose estimated footprint fits the budget."""
    best = 1
    for d in range(1, nc + 1):
        if nc % d == 0 and _tile_footprint_bytes(d, h, w, itemsize) <= budget_bytes:
            best = d
    return best


def ssim_loss(x, y, *, tile_b=None):
    """x, y: [N, C, H, W] float32/bfloat16 images. Returns scalar f32 loss."""
    assert x.shape == y.shape
    n, c, h, w = x.shape
    assert h >= 2 and w >= 2, "reflection pad of 1 needs at least 2 pixels per spatial dim"
    nc = n * c
    xf = x.reshape(nc, h, w)
    yf = y.reshape(nc, h, w)

    itemsize = jnp.dtype(x.dtype).itemsize
    vmem_limit = _VMEM_LIMIT_DEFAULT
    if tile_b is None:
        tile_b = _pick_tile_b(nc, h, w, itemsize, int(_VMEM_FRACTION * vmem_limit))
    assert nc % tile_b == 0, (nc, tile_b)
    num_tiles = nc // tile_b

    # If even a single [1, H, W] slice overshoots the budget (very large
    # images), raise the scoped limit instead of spilling.  v5e/v6e have
    # 128 MiB physical VMEM; on v7x (64 MiB) images that still don't fit would
    # need an H-tiled halo path, which is not implemented here.
    needed = _tile_footprint_bytes(tile_b, h, w, itemsize)
    if needed > int(_VMEM_FRACTION * vmem_limit):
        vmem_limit = min(int(needed / _VMEM_FRACTION) + (1 << 20), 112 * 1024 * 1024)

    img_spec = pl.BlockSpec((tile_b, h, w), lambda b: (b, 0, 0))

    partials = pl.pallas_call(
        _ssim_tile_kernel,
        out_shape=jax.ShapeDtypeStruct((num_tiles, 8, 128), jnp.float32),
        grid=(num_tiles,),
        in_specs=[img_spec, img_spec],
        out_specs=pl.BlockSpec((1, 8, 128), lambda b: (b, 0, 0)),
        compiler_params=pltpu.CompilerParams(
            # Grid steps are fully independent (per-tile partial sums), so the
            # axis is parallel -> both v7x TensorCores share the work.
            dimension_semantics=("parallel",),
            vmem_limit_bytes=vmem_limit,
        ),
    )(xf, yf)

    # Each (8,128) block holds one broadcast scalar; reduce the tiny vector here.
    return jnp.sum(partials[:, 0, 0]) / float(n * c * h * w)


# ---------------- pure-JAX reference (for the self-check below) ----------------

def _ssim_loss_ref(x, y):
    def pool(a):
        ap = jnp.pad(a, ((0, 0), (0, 0), (1, 1), (1, 1)), mode="reflect")
        hh, ww = a.shape[2], a.shape[3]
        s = sum(ap[:, :, i:i + hh, j:j + ww] for i in range(3) for j in range(3))
        return s / 9.0

    x = x.astype(jnp.float32)
    y = y.astype(jnp.float32)
    mu_x, mu_y = pool(x), pool(y)
    sigma_x = pool(x * x) - mu_x ** 2
    sigma_y = pool(y * y) - mu_y ** 2
    sigma_xy = pool(x * y) - mu_x * mu_y
    ssim_n = (2 * mu_x * mu_y + _C1) * (2 * sigma_xy + _C2)
    ssim_d = (mu_x ** 2 + mu_y ** 2 + _C1) * (sigma_x + sigma_y + _C2)
    return jnp.mean(jnp.clip((1 - ssim_n / ssim_d + 1e-20) / 2, 0.0, 1.0))


if __name__ == "__main__":
    key = jax.random.PRNGKey(0)
    k1, k2 = jax.random.split(key)
    N, C, H, W = 2, 4, 16, 16
    x = jax.random.uniform(k1, (N, C, H, W), dtype=jnp.float32)
    y = jax.random.uniform(k2, (N, C, H, W), dtype=jnp.float32)

    ref = _ssim_loss_ref(x, y)

    # Multi-tile path: tile_b=2 -> 4 parallel grid steps, 4 partial sums.
    loss_multi = ssim_loss(x, y, tile_b=2)
    jax.block_until_ready(loss_multi)
    assert abs(float(loss_multi) - float(ref)) < 1e-4, (float(loss_multi), float(ref))

    # Auto-sized path (footprint-aware tile picker; single grid step here).
    loss_auto = ssim_loss(x, y)
    jax.block_until_ready(loss_auto)
    assert abs(float(loss_auto) - float(ref)) < 1e-4, (float(loss_auto), float(ref))

    print("KERNEL_OK")
</pallas_src>

<mosaic_0001>
module attributes {stable_mosaic.version = 11 : i64} {
  func.func @_ssim_tile_kernel(%arg0: i32, %arg1: memref<2x16x16xf32, #tpu.memory_space<vmem>>, %arg2: memref<2x16x16xf32, #tpu.memory_space<vmem>>, %arg3: memref<1x8x128xf32, #tpu.memory_space<vmem>>) attributes {dimension_semantics = [#tpu.dimension_semantics<parallel>], iteration_bounds = array<i64: 4>, scalar_prefetch = 0 : i64, scratch_operands = 0 : i64, tpu.core_type = #tpu.core_type<tc>, window_params = [{transform_indices = @transform_0, window_bounds = array<i64: 2, 16, 16>}, {transform_indices = @transform_1, window_bounds = array<i64: 2, 16, 16>}, {transform_indices = @transform_2, window_bounds = array<i64: 1, 8, 128>}]} {
    %c0 = arith.constant 0 : index
    %c0_0 = arith.constant 0 : index
    %c0_1 = arith.constant 0 : index
    %0 = vector.load %arg1[%c0, %c0_0, %c0_1] : memref<2x16x16xf32, #tpu.memory_space<vmem>>, vector<2x16x16xf32>
    %c0_2 = arith.constant 0 : index
    %c0_3 = arith.constant 0 : index
    %c0_4 = arith.constant 0 : index
    %1 = vector.load %arg2[%c0_2, %c0_3, %c0_4] : memref<2x16x16xf32, #tpu.memory_space<vmem>>, vector<2x16x16xf32>
    %2 = vector.extract_strided_slice %0 {offsets = [0, 1, 0], sizes = [2, 1, 16], strides = [1, 1, 1]} : vector<2x16x16xf32> to vector<2x1x16xf32>
    %3 = vector.extract_strided_slice %0 {offsets = [0, 0, 0], sizes = [2, 15, 16], strides = [1, 1, 1]} : vector<2x16x16xf32> to vector<2x15x16xf32>
    %4 = tpu.concatenate %2, %3 in 1 : vector<2x1x16xf32>, vector<2x15x16xf32> -> vector<2x16x16xf32>
    %5 = vector.extract_strided_slice %0 {offsets = [0, 1, 0], sizes = [2, 15, 16], strides = [1, 1, 1]} : vector<2x16x16xf32> to vector<2x15x16xf32>
    %6 = vector.extract_strided_slice %0 {offsets = [0, 14, 0], sizes = [2, 1, 16], strides = [1, 1, 1]} : vector<2x16x16xf32> to vector<2x1x16xf32>
    %7 = tpu.concatenate %5, %6 in 1 : vector<2x15x16xf32>, vector<2x1x16xf32> -> vector<2x16x16xf32>
    %8 = arith.addf %4, %0 : vector<2x16x16xf32>
    %9 = arith.addf %8, %7 : vector<2x16x16xf32>
    %10 = vector.extract_strided_slice %9 {offsets = [0, 0, 1], sizes = [2, 16, 1], strides = [1, 1, 1]} : vector<2x16x16xf32> to vector<2x16x1xf32>
    %11 = vector.extract_strided_slice %9 {offsets = [0, 0, 0], sizes = [2, 16, 15], strides = [1, 1, 1]} : vector<2x16x16xf32> to vector<2x16x15xf32>
    %12 = tpu.concatenate %10, %11 in 2 : vector<2x16x1xf32>, vector<2x16x15xf32> -> vector<2x16x16xf32>
    %13 = vector.extract_strided_slice %9 {offsets = [0, 0, 1], sizes = [2, 16, 15], strides = [1, 1, 1]} : vector<2x16x16xf32> to vector<2x16x15xf32>
    %14 = vector.extract_strided_slice %9 {offsets = [0, 0, 14], sizes = [2, 16, 1], strides = [1, 1, 1]} : vector<2x16x16xf32> to vector<2x16x1xf32>
    %15 = tpu.concatenate %13, %14 in 2 : vector<2x16x15xf32>, vector<2x16x1xf32> -> vector<2x16x16xf32>
    %16 = arith.addf %12, %9 : vector<2x16x16xf32>
    %17 = arith.addf %16, %15 : vector<2x16x16xf32>
    %18 = vector.extract_strided_slice %1 {offsets = [0, 1, 0], sizes = [2, 1, 16], strides = [1, 1, 1]} : vector<2x16x16xf32> to vector<2x1x16xf32>
    %19 = vector.extract_strided_slice %1 {offsets = [0, 0, 0], sizes = [2, 15, 16], strides = [1, 1, 1]} : vector<2x16x16xf32> to vector<2x15x16xf32>
    %20 = tpu.concatenate %18, %19 in 1 : vector<2x1x16xf32>, vector<2x15x16xf32> -> vector<2x16x16xf32>
    %21 = vector.extract_strided_slice %1 {offsets = [0, 1, 0], sizes = [2, 15, 16], strides = [1, 1, 1]} : vector<2x16x16xf32> to vector<2x15x16xf32>
    %22 = vector.extract_strided_slice %1 {offsets = [0, 14, 0], sizes = [2, 1, 16], strides = [1, 1, 1]} : vector<2x16x16xf32> to vector<2x1x16xf32>
    %23 = tpu.concatenate %21, %22 in 1 : vector<2x15x16xf32>, vector<2x1x16xf32> -> vector<2x16x16xf32>
    %24 = arith.addf %20, %1 : vector<2x16x16xf32>
    %25 = arith.addf %24, %23 : vector<2x16x16xf32>
    %26 = vector.extract_strided_slice %25 {offsets = [0, 0, 1], sizes = [2, 16, 1], strides = [1, 1, 1]} : vector<2x16x16xf32> to vector<2x16x1xf32>
    %27 = vector.extract_strided_slice %25 {offsets = [0, 0, 0], sizes = [2, 16, 15], strides = [1, 1, 1]} : vector<2x16x16xf32> to vector<2x16x15xf32>
    %28 = tpu.concatenate %26, %27 in 2 : vector<2x16x1xf32>, vector<2x16x15xf32> -> vector<2x16x16xf32>
    %29 = vector.extract_strided_slice %25 {offsets = [0, 0, 1], sizes = [2, 16, 15], strides = [1, 1, 1]} : vector<2x16x16xf32> to vector<2x16x15xf32>
    %30 = vector.extract_strided_slice %25 {offsets = [0, 0, 14], sizes = [2, 16, 1], strides = [1, 1, 1]} : vector<2x16x16xf32> to vector<2x16x1xf32>
    %31 = tpu.concatenate %29, %30 in 2 : vector<2x16x15xf32>, vector<2x16x1xf32> -> vector<2x16x16xf32>
    %32 = arith.addf %28, %25 : vector<2x16x16xf32>
    %33 = arith.addf %32, %31 : vector<2x16x16xf32>
    %34 = arith.mulf %0, %1 : vector<2x16x16xf32>
    %35 = vector.extract_strided_slice %34 {offsets = [0, 1, 0], sizes = [2, 1, 16], strides = [1, 1, 1]} : vector<2x16x16xf32> to vector<2x1x16xf32>
    %36 = vector.extract_strided_slice %34 {offsets = [0, 0, 0], sizes = [2, 15, 16], strides = [1, 1, 1]} : vector<2x16x16xf32> to vector<2x15x16xf32>
    %37 = tpu.concatenate %35, %36 in 1 : vector<2x1x16xf32>, vector<2x15x16xf32> -> vector<2x16x16xf32>
    %38 = vector.extract_strided_slice %34 {offsets = [0, 1, 0], sizes = [2, 15, 16], strides = [1, 1, 1]} : vector<2x16x16xf32> to vector<2x15x16xf32>
    %39 = vector.extract_strided_slice %34 {offsets = [0, 14, 0], sizes = [2, 1, 16], strides = [1, 1, 1]} : vector<2x16x16xf32> to vector<2x1x16xf32>
    %40 = tpu.concatenate %38, %39 in 1 : vector<2x15x16xf32>, vector<2x1x16xf32> -> vector<2x16x16xf32>
    %41 = arith.addf %37, %34 : vector<2x16x16xf32>
    %42 = arith.addf %41, %40 : vector<2x16x16xf32>
    %43 = vector.extract_strided_slice %42 {offsets = [0, 0, 1], sizes = [2, 16, 1], strides = [1, 1, 1]} : vector<2x16x16xf32> to vector<2x16x1xf32>
    %44 = vector.extract_strided_slice %42 {offsets = [0, 0, 0], sizes = [2, 16, 15], strides = [1, 1, 1]} : vector<2x16x16xf32> to vector<2x16x15xf32>
    %45 = tpu.concatenate %43, %44 in 2 : vector<2x16x1xf32>, vector<2x16x15xf32> -> vector<2x16x16xf32>
    %46 = vector.extract_strided_slice %42 {offsets = [0, 0, 1], sizes = [2, 16, 15], strides = [1, 1, 1]} : vector<2x16x16xf32> to vector<2x16x15xf32>
    %47 = vector.extract_strided_slice %42 {offsets = [0, 0, 14], sizes = [2, 16, 1], strides = [1, 1, 1]} : vector<2x16x16xf32> to vector<2x16x1xf32>
    %48 = tpu.concatenate %46, %47 in 2 : vector<2x16x15xf32>, vector<2x16x1xf32> -> vector<2x16x16xf32>
    %49 = arith.addf %45, %42 : vector<2x16x16xf32>
    %50 = arith.addf %49, %48 : vector<2x16x16xf32>
    %51 = arith.mulf %0, %0 : vector<2x16x16xf32>
    %52 = arith.mulf %1, %1 : vector<2x16x16xf32>
    %53 = arith.addf %51, %52 : vector<2x16x16xf32>
    %54 = vector.extract_strided_slice %53 {offsets = [0, 1, 0], sizes = [2, 1, 16], strides = [1, 1, 1]} : vector<2x16x16xf32> to vector<2x1x16xf32>
    %55 = vector.extract_strided_slice %53 {offsets = [0, 0, 0], sizes = [2, 15, 16], strides = [1, 1, 1]} : vector<2x16x16xf32> to vector<2x15x16xf32>
    %56 = tpu.concatenate %54, %55 in 1 : vector<2x1x16xf32>, vector<2x15x16xf32> -> vector<2x16x16xf32>
    %57 = vector.extract_strided_slice %53 {offsets = [0, 1, 0], sizes = [2, 15, 16], strides = [1, 1, 1]} : vector<2x16x16xf32> to vector<2x15x16xf32>
    %58 = vector.extract_strided_slice %53 {offsets = [0, 14, 0], sizes = [2, 1, 16], strides = [1, 1, 1]} : vector<2x16x16xf32> to vector<2x1x16xf32>
    %59 = tpu.concatenate %57, %58 in 1 : vector<2x15x16xf32>, vector<2x1x16xf32> -> vector<2x16x16xf32>
    %60 = arith.addf %56, %53 : vector<2x16x16xf32>
    %61 = arith.addf %60, %59 : vector<2x16x16xf32>
    %62 = vector.extract_strided_slice %61 {offsets = [0, 0, 1], sizes = [2, 16, 1], strides = [1, 1, 1]} : vector<2x16x16xf32> to vector<2x16x1xf32>
    %63 = vector.extract_strided_slice %61 {offsets = [0, 0, 0], sizes = [2, 16, 15], strides = [1, 1, 1]} : vector<2x16x16xf32> to vector<2x16x15xf32>
    %64 = tpu.concatenate %62, %63 in 2 : vector<2x16x1xf32>, vector<2x16x15xf32> -> vector<2x16x16xf32>
    %65 = vector.extract_strided_slice %61 {offsets = [0, 0, 1], sizes = [2, 16, 15], strides = [1, 1, 1]} : vector<2x16x16xf32> to vector<2x16x15xf32>
    %66 = vector.extract_strided_slice %61 {offsets = [0, 0, 14], sizes = [2, 16, 1], strides = [1, 1, 1]} : vector<2x16x16xf32> to vector<2x16x1xf32>
    %67 = tpu.concatenate %65, %66 in 2 : vector<2x16x15xf32>, vector<2x16x1xf32> -> vector<2x16x16xf32>
    %68 = arith.addf %64, %61 : vector<2x16x16xf32>
    %69 = arith.addf %68, %67 : vector<2x16x16xf32>
    %70 = arith.mulf %17, %33 : vector<2x16x16xf32>
    %71 = arith.mulf %17, %17 : vector<2x16x16xf32>
    %72 = arith.mulf %33, %33 : vector<2x16x16xf32>
    %73 = arith.addf %71, %72 : vector<2x16x16xf32>
    %cst = arith.constant 2.000000e+00 : f32
    %74 = vector.broadcast %cst : f32 to vector<2x16x16xf32>
    %75 = arith.mulf %74, %70 : vector<2x16x16xf32>
    %cst_5 = arith.constant 8.100000e-03 : f32
    %76 = vector.broadcast %cst_5 : f32 to vector<2x16x16xf32>
    %77 = arith.addf %75, %76 : vector<2x16x16xf32>
    %cst_6 = arith.constant 1.800000e+01 : f32
    %78 = vector.broadcast %cst_6 : f32 to vector<2x16x16xf32>
    %79 = arith.mulf %78, %50 : vector<2x16x16xf32>
    %cst_7 = arith.constant 2.000000e+00 : f32
    %80 = vector.broadcast %cst_7 : f32 to vector<2x16x16xf32>
    %81 = arith.mulf %80, %70 : vector<2x16x16xf32>
    %82 = arith.subf %79, %81 : vector<2x16x16xf32>
    %cst_8 = arith.constant 7.290000e-02 : f32
    %83 = vector.broadcast %cst_8 : f32 to vector<2x16x16xf32>
    %84 = arith.addf %82, %83 : vector<2x16x16xf32>
    %85 = arith.mulf %77, %84 : vector<2x16x16xf32>
    %cst_9 = arith.constant 8.100000e-03 : f32
    %86 = vector.broadcast %cst_9 : f32 to vector<2x16x16xf32>
    %87 = arith.addf %73, %86 : vector<2x16x16xf32>
    %cst_10 = arith.constant 9.000000e+00 : f32
    %88 = vector.broadcast %cst_10 : f32 to vector<2x16x16xf32>
    %89 = arith.mulf %88, %69 : vector<2x16x16xf32>
    %90 = arith.subf %89, %73 : vector<2x16x16xf32>
    %cst_11 = arith.constant 7.290000e-02 : f32
    %91 = vector.broadcast %cst_11 : f32 to vector<2x16x16xf32>
    %92 = arith.addf %90, %91 : vector<2x16x16xf32>
    %93 = arith.mulf %87, %92 : vector<2x16x16xf32>
    %94 = tpu.reciprocal %93 {approx = true} : vector<2x16x16xf32> -> vector<2x16x16xf32>
    %95 = arith.mulf %93, %94 : vector<2x16x16xf32>
    %cst_12 = arith.constant 2.000000e+00 : f32
    %96 = vector.broadcast %cst_12 : f32 to vector<2x16x16xf32>
    %97 = arith.subf %96, %95 : vector<2x16x16xf32>
    %98 = arith.mulf %94, %97 : vector<2x16x16xf32>
    %99 = arith.mulf %85, %98 : vector<2x16x16xf32>
    %cst_13 = arith.constant 1.000000e+00 : f32
    %100 = vector.broadcast %cst_13 : f32 to vector<2x16x16xf32>
    %101 = arith.subf %100, %99 : vector<2x16x16xf32>
    %cst_14 = arith.constant 9.99999968E-21 : f32
    %102 = vector.broadcast %cst_14 : f32 to vector<2x16x16xf32>
    %103 = arith.addf %101, %102 : vector<2x16x16xf32>
    %cst_15 = arith.constant 5.000000e-01 : f32
    %104 = vector.broadcast %cst_15 : f32 to vector<2x16x16xf32>
    %105 = arith.mulf %103, %104 : vector<2x16x16xf32>
    %cst_16 = arith.constant 0.000000e+00 : f32
    %cst_17 = arith.constant 1.000000e+00 : f32
    %106 = vector.broadcast %cst_16 : f32 to vector<2x16x16xf32>
    %107 = arith.maximumf %106, %105 : vector<2x16x16xf32>
    %108 = vector.broadcast %cst_17 : f32 to vector<2x16x16xf32>
    %109 = arith.minimumf %108, %107 : vector<2x16x16xf32>
    %110 = vector.shape_cast %109 : vector<2x16x16xf32> to vector<1x2x16x16xf32>
    %cst_18 = arith.constant dense<0.000000e+00> : vector<1xf32>
    %111 = vector.multi_reduction <add>, %110, %cst_18 [1, 2, 3] : vector<1x2x16x16xf32> to vector<1xf32>
    %112 = vector.shape_cast %111 : vector<1xf32> to vector<1x1x1x1xf32>
    %113 = vector.extract %112[0, 0, 0, 0] : f32 from vector<1x1x1x1xf32>
    %114 = vector.broadcast %113 : f32 to vector<1x8x128xf32>
    %c0_19 = arith.constant 0 : index
    %c0_20 = arith.constant 0 : index
    %c0_21 = arith.constant 0 : index
    %115 = vector.load %arg3[%c0_19, %c0_20, %c0_21] : memref<1x8x128xf32, #tpu.memory_space<vmem>>, vector<1x8x128xf32>
    tpu.vector_store %arg3[%c0_19, %c0_20, %c0_21], %114 {strides = array<i32>} : memref<1x8x128xf32, #tpu.memory_space<vmem>>, vector<1x8x128xf32>,
    return
  }
  func.func @transform_0(%arg0: i32) -> (i32, i32, i32) {
    %c0_i32 = arith.constant 0 : i32
    %c0_i32_0 = arith.constant 0 : i32
    %c0_i32_1 = arith.constant 0 : i32
    return %arg0, %c0_i32, %c0_i32_0 : i32, i32, i32
  }
  func.func @transform_1(%arg0: i32) -> (i32, i32, i32) {
    %c0_i32 = arith.constant 0 : i32
    %c0_i32_0 = arith.constant 0 : i32
    %c0_i32_1 = arith.constant 0 : i32
    return %arg0, %c0_i32, %c0_i32_0 : i32, i32, i32
  }
  func.func @transform_2(%arg0: i32) -> (i32, i32, i32) {
    %c0_i32 = arith.constant 0 : i32
    %c0_i32_0 = arith.constant 0 : i32
    %c0_i32_1 = arith.constant 0 : i32
    return %arg0, %c0_i32, %c0_i32_0 : i32, i32, i32
  }
}

</mosaic_0001>

<llo_original>
// kernel: tpu_custom_call.1
$region0: #{tpu_custom_call.1}
  #allocation0 [shape = 'u32[]', space=smem, size = 0x4, offset = 0x4, fixed_abs, tag = 'smem constant byte address 0x4 - core index']
  #allocation1 [shape = 'u32[72,128]{1,0:T(1,128)}', space=vmem, size = 0x9000, scoped, tag = 'internal scratch']
  %s0 = inlined_call_operand.hbm [shape: f32[8,16,16], index: 0, kind: input, shape index: {}]
  %s1 = inlined_call_operand.hbm [shape: f32[8,16,16], index: 1, kind: input, shape index: {}]
  %s2 = inlined_call_operand.hbm [shape: f32[4,8,128], index: 2, kind: output, shape index: {}]
  %s3 = sld [smem:[#allocation0]]
  $region49: #{tpu_custom_call.1} parent=0
    _
  %s5 = ssub.s32 1, %s3
  %s6 = scalar_select 0, %s5, %s3
  $region1: #{tpu_custom_call.1} parent=0
    #allocation2 [shape = 'u8[32768]{0}', space=vmem, size = 0x8000, scoped, tag = 'input window, operand 0']
    #allocation3 [shape = 's32[2]{0}', space=sflag, size = 0x8, scoped, tag = 'scoped memory for tpu_custom_call.1']
    #allocation4 [shape = 's32[2]{0}', space=sflag, size = 0x8, scoped, tag = 'scoped memory for tpu_custom_call.1']
    #allocation5 [shape = 'u8[32768]{0}', space=vmem, size = 0x8000, scoped, tag = 'input window, operand 1']
    #allocation6 [shape = 's32[2]{0}', space=sflag, size = 0x8, scoped, tag = 'scoped memory for tpu_custom_call.1']
    #allocation7 [shape = 'u8[8192]{0}', space=vmem, size = 0x2000, scoped, tag = 'output window, operand 0']
    %7 = vsyncpa [#allocation3], 0
    %s8 = scalar_lea.sflag [#allocation3], 1
    %9 = vsyncpa %s8, 0
    %10 = vsyncpa [#allocation6], 0
    %s11 = scalar_lea.sflag [#allocation6], 1
    %12 = vsyncpa %s11, 0
    %13 = vsyncpa [#allocation4], 0
    %s14 = scalar_lea.sflag [#allocation4], 1
    %15 = vsyncpa %s14, 0
    loop: start=0, step=1, limit=6
    $region2: #{tpu_custom_call.1} parent=1 // loop_pre_header
      _
    $region3: #{tpu_custom_call.1} parent=1 // loop_header
      %s17 = sphi 0, %s21
      %p18 = scmp.ge.s32.totalorder %s17, 6
      %s27 = sphi 0, %s29
      %s30 = sphi 0, %s27
      %s31 = sphi 0, %s30
      %s47 = sphi 0, %s31
      %s53 = sphi 0, %s55
      %s56 = sphi 0, %s53
      %s57 = sphi 0, %s56
      %s73 = sphi 0, %s57
      %s79 = sphi 0, %s81
      %s82 = sphi 0, %s79
      %s83 = sphi 0, %s82
      %s99 = sphi 0, %s83
    $region4: #{tpu_custom_call.1} parent=1 // loop_header_branch
      %20 = sbr.rel (%p18) target = $region8
    $region5: #{tpu_custom_call.1} parent=1 // loop_body
      %s22 = ssub.s32 %s17, 1
      %s23 = ssub.s32 %s17, 2
      %s24 = sadd.s32 %s17, 1
      %s25 = ssub.s32 %s17, %s24
      %p26 = scmp.eq.s32.totalorder %s25, 0
      %s28 = sadd.s32 %s27, 1
      %s29 = scalar_select %p26, %s27, %s28
      %p32 = pneg %p26
      %p33 = scmp.eq.s32.totalorder %s17, 3
      %p34 = por %p32, %p33
      %p35 = scmp.ne.s32.totalorder %s27, %s30
      %p36 = scmp.eq.s32.totalorder %s17, 0
      %p37 = por %p35, %p36
      %p38 = scmp.ne.s32.totalorder %s27, %s30
      %p39 = scmp.eq.s32.totalorder %s22, 3
      %p40 = por %p38, %p39
      %p41 = scmp.ne.s32.totalorder %s30, %s31
      %p42 = scmp.eq.s32.totalorder %s22, 0
      %p43 = por %p41, %p42
      %p44 = scmp.ne.s32.totalorder %s30, %s31
      %p45 = scmp.eq.s32.totalorder %s23, 3
      %p46 = por %p44, %p45
      %p48 = scmp.ne.s32.totalorder %s31, %s47
      %p49 = scmp.eq.s32.totalorder %s23, 0
      %p50 = por %p48, %p49
      %s51 = ssub.s32 %s17, %s24
      %p52 = scmp.eq.s32.totalorder %s51, 0
      %s54 = sadd.s32 %s53, 1
      %s55 = scalar_select %p52, %s53, %s54
      %p58 = pneg %p52
      %p59 = scmp.eq.s32.totalorder %s17, 3
      %p60 = por %p58, %p59
      %p61 = scmp.ne.s32.totalorder %s53, %s56
      %p62 = scmp.eq.s32.totalorder %s17, 0
      %p63 = por %p61, %p62
      %p64 = scmp.ne.s32.totalorder %s53, %s56
      %p65 = scmp.eq.s32.totalorder %s22, 3
      %p66 = por %p64, %p65
      %p67 = scmp.ne.s32.totalorder %s56, %s57
      %p68 = scmp.eq.s32.totalorder %s22, 0
      %p69 = por %p67, %p68
      %p70 = scmp.ne.s32.totalorder %s56, %s57
      %p71 = scmp.eq.s32.totalorder %s23, 3
      %p72 = por %p70, %p71
      %p74 = scmp.ne.s32.totalorder %s57, %s73
      %p75 = scmp.eq.s32.totalorder %s23, 0
      %p76 = por %p74, %p75
      %s77 = ssub.s32 %s17, %s24
      %p78 = scmp.eq.s32.totalorder %s77, 0
      %s80 = sadd.s32 %s79, 1
      %s81 = scalar_select %p78, %s79, %s80
      %p84 = pneg %p78
      %p85 = scmp.eq.s32.totalorder %s17, 3
      %p86 = por %p84, %p85
      %p87 = scmp.ne.s32.totalorder %s79, %s82
      %p88 = scmp.eq.s32.totalorder %s17, 0
      %p89 = por %p87, %p88
      %p90 = scmp.ne.s32.totalorder %s79, %s82
      %p91 = scmp.eq.s32.totalorder %s22, 3
      %p92 = por %p90, %p91
      %p93 = scmp.ne.s32.totalorder %s82, %s83
      %p94 = scmp.eq.s32.totalorder %s22, 0
      %p95 = por %p93, %p94
      %p96 = scmp.ne.s32.totalorder %s82, %s83
      %p97 = scmp.eq.s32.totalorder %s23, 3
      %p98 = por %p96, %p97
      %p100 = scmp.ne.s32.totalorder %s83, %s99
      %p101 = scmp.eq.s32.totalorder %s23, 0
      %p102 = por %p100, %p101
      %p103 = scmp.le.s32.totalorder 1, %s17
      %p104 = scmp.lt.s32.totalorder %s17, 5
      %p105 = pnand %p103, %p104
      %p106 = pneg %p105
      // Predicated region
      $region9: #{tpu_custom_call.1} parent=5 // pred_check
        _
      $region10: #{tpu_custom_call.1} parent=5 // pred_check_branch
        %108 = sbr.rel (%p105) target = $region12
      $region11: #{tpu_custom_call.1} parent=5 // pred_region
        %s109 = ssub.s32 %s17, 1
      $region12: #{tpu_custom_call.1} parent=5 // pred_fallthru
        _
      %p110 = scmp.lt.s32.totalorder %s17, 4
      // Predicated region
      $region13: #{tpu_custom_call.1} parent=5 // pred_check
        %p111 = pneg %p110
      $region14: #{tpu_custom_call.1} parent=5 // pred_check_branch
        %113 = sbr.rel (%p111) target = $region16
      $region15: #{tpu_custom_call.1} parent=5 // pred_region
        // Predicated region
        $region17: #{tpu_custom_call.1} parent=15 // pred_check
          %p114 = pneg %p37
        $region18: #{tpu_custom_call.1} parent=15 // pred_check_branch
          %116 = sbr.rel (%p114) target = $region20
        $region19: #{tpu_custom_call.1} parent=15 // pred_region
          %s117 = sand.u32 %s27, 1
          %s118 = scalar_lea.sflag [#allocation3], %s117
          %s119 = sand.u32 %s27, 1
          %s120 = smul.addr %s119, 32
          %s121 = scalar_lea.vmem [#allocation2], %s120
          %s122 = smul.u32 2, %s17
          %124 = vsyncadd %s118, 0
          %s125 = smul.addr %s122, 2
          %s126 = smul.addr %s125, 8
          %s127 = scalar_lea.hbm %s0, %s126
          %s128 = sshll.u32 %s127, 4
          %s129 = int_to_ptr.hbm [resolvable:$true] %s128
          %s130 = sshll.u32 %s121, 4
          %s131 = int_to_ptr.vmem [resolvable:$true] %s130
          %136 = dma.hbm_to_vmem [thread:$0]  %s129, 512, %s131, %s118, 128, 128, 8
        $region20: #{tpu_custom_call.1} parent=15 // pred_fallthru
          _
        // Predicated region
        $region21: #{tpu_custom_call.1} parent=15 // pred_check
          %p137 = pneg %p63
        $region22: #{tpu_custom_call.1} parent=15 // pred_check_branch
          %139 = sbr.rel (%p137) target = $region24
        $region23: #{tpu_custom_call.1} parent=15 // pred_region
          %s140 = sand.u32 %s53, 1
          %s141 = scalar_lea.sflag [#allocation6], %s140
          %s142 = sand.u32 %s53, 1
          %s143 = smul.addr %s142, 32
          %s144 = scalar_lea.vmem [#allocation5], %s143
          %s145 = smul.u32 2, %s17
          %147 = vsyncadd %s141, 0
          %s148 = smul.addr %s145, 2
          %s149 = smul.addr %s148, 8
          %s150 = scalar_lea.hbm %s1, %s149
          %s151 = sshll.u32 %s150, 4
          %s152 = int_to_ptr.hbm [resolvable:$true] %s151
          %s153 = sshll.u32 %s144, 4
          %s154 = int_to_ptr.vmem [resolvable:$true] %s153
          %159 = dma.hbm_to_vmem [thread:$0]  %s152, 512, %s154, %s141, 128, 128, 8
        $region24: #{tpu_custom_call.1} parent=15 // pred_fallthru
          _
      $region16: #{tpu_custom_call.1} parent=5 // pred_fallthru
        _
      %p160 = scmp.le.s32.totalorder 1, %s17
      %p161 = scmp.lt.s32.totalorder %s17, 5
      %p162 = pnand %p160, %p161
      %p163 = pneg %p162
      // Predicated region
      $region25: #{tpu_custom_call.1} parent=5 // pred_check
        _
      $region26: #{tpu_custom_call.1} parent=5 // pred_check_branch
        %165 = sbr.rel (%p162) target = $region28
      $region27: #{tpu_custom_call.1} parent=5 // pred_region
        %s166 = ssub.s32 %s17, 1
        %s167 = sand.u32 %s30, 1
        %s168 = scalar_lea.sflag [#allocation3], %s167
        %s169 = sand.u32 %s30, 1
        %s170 = smul.addr %s169, 32
        %s171 = scalar_lea.vmem [#allocation2], %s170
        // Predicated region
        $region29: #{tpu_custom_call.1} parent=27 // pred_check
          %p172 = pneg %p43
        $region30: #{tpu_custom_call.1} parent=27 // pred_check_branch
          %174 = sbr.rel (%p172) target = $region32
        $region31: #{tpu_custom_call.1} parent=27 // pred_region
          %176 = dma.done %s168, 512
        $region32: #{tpu_custom_call.1} parent=27 // pred_fallthru
          _
        %s177 = sand.u32 %s56, 1
        %s178 = scalar_lea.sflag [#allocation6], %s177
        %s179 = sand.u32 %s56, 1
        %s180 = smul.addr %s179, 32
        %s181 = scalar_lea.vmem [#allocation5], %s180
        // Predicated region
        $region33: #{tpu_custom_call.1} parent=27 // pred_check
          %p182 = pneg %p69
        $region34: #{tpu_custom_call.1} parent=27 // pred_check_branch
          %184 = sbr.rel (%p182) target = $region36
        $region35: #{tpu_custom_call.1} parent=27 // pred_region
          %186 = dma.done %s178, 512
        $region36: #{tpu_custom_call.1} parent=27 // pred_fallthru
          _
        %s187 = sand.u32 %s30, 1
        %s188 = scalar_lea.sflag [#allocation3], %s187
        %s189 = sand.u32 %s30, 1
        %s190 = smul.addr %s189, 32
        %s191 = scalar_lea.vmem [#allocation2], %s190
        %p192 = pneg %p43
        %p193 = pneg %p40
        %s194 = sand.u32 %s56, 1
        %s195 = scalar_lea.sflag [#allocation6], %s194
        %s196 = sand.u32 %s56, 1
        %s197 = smul.addr %s196, 32
        %s198 = scalar_lea.vmem [#allocation5], %s197
        %p199 = pneg %p69
        %p200 = pneg %p66
        %p201 = pneg %p95
        %p202 = pneg %p92
        %s203 = sand.u32 %s82, 1
        %s204 = scalar_lea.sflag [#allocation4], %s203
        %s205 = sand.u32 %s82, 1
        %s206 = smul.addr %s205, 8
        %s207 = scalar_lea.vmem [#allocation7], %s206
        %s208 = smul.u32 2, %s22
        %s209 = smul.u32 2, %s22
        %v210 = vld [vmem:[%s171] sm:$0xff]
        %v211 = vld [vmem:[%s171 + $0x8] sm:$0xff]
        %v212 = vld [vmem:[%s171 + $0x10] sm:$0xff]
        %v213 = vld [vmem:[%s171 + $0x18] sm:$0xff]
        %v214 = vld [vmem:[%s181] sm:$0xff]
        %v215 = vld [vmem:[%s181 + $0x8] sm:$0xff]
        %v216 = vld [vmem:[%s181 + $0x10] sm:$0xff]
        %v217 = vld [vmem:[%s181 + $0x18] sm:$0xff]
        %v220 = vrot.slane %v210, 1
        %v221 = vrot.slane %v212, 1
        %vm226 = vcmask 1040384
        %v227 = vrot.slane %v210, 7
        %v228 = vrot.slane %v211, 7
        %v229 = vsel %vm226, %v227, %v228
        %v230 = vrot.slane %v212, 7
        %v231 = vrot.slane %v213, 7
        %v232 = vsel %vm226, %v230, %v231
        %v237 = vsel %vm226, %v220, %v227
        %v238 = vsel %vm226, %v221, %v230
        %vm239 = vcmask 1046528
        %v240 = vrot.slane %v211, 1
        %v241 = vsel %vm239, %v220, %v240
        %v242 = vrot.slane %v213, 1
        %v243 = vsel %vm239, %v221, %v242
        %v250 = vsel %vm239, %v240, %v228
        %v251 = vsel %vm239, %v242, %v231
        %v252 = vadd.f32 %v237, %v210
        %v253 = vadd.f32 %v229, %v211
        %v254 = vadd.f32 %v238, %v212
        %v255 = vadd.f32 %v232, %v213
        %v256 = vadd.f32 %v252, %v241
        %v257 = vadd.f32 %v253, %v250
        %v258 = vadd.f32 %v254, %v243
        %v259 = vadd.f32 %v255, %v251
        %264 = vrot.lane.b32.xlu0 %v256, 127
        %v265 = vpop.permute.xlu0 %264
        %266 = vrot.lane.b32.xlu0 %v257, 127
        %v267 = vpop.permute.xlu0 %266
        %268 = vrot.lane.b32.xlu0 %v258, 127
        %v269 = vpop.permute.xlu0 %268
        %270 = vrot.lane.b32.xlu0 %v259, 127
        %v271 = vpop.permute.xlu0 %270
        %276 = vrot.lane.b32.xlu0 %v256, 1
        %v277 = vpop.permute.xlu0 %276
        %278 = vrot.lane.b32.xlu0 %v257, 1
        %v279 = vpop.permute.xlu0 %278
        %280 = vrot.lane.b32.xlu0 %v258, 1
        %v281 = vpop.permute.xlu0 %280
        %282 = vrot.lane.b32.xlu0 %v259, 1
        %v283 = vpop.permute.xlu0 %282
        %vm288 = vcmask 7168
        %v289 = vsel %vm288, %v265, %v277
        %v290 = vsel %vm288, %v267, %v279
        %v291 = vsel %vm288, %v269, %v281
        %v292 = vsel %vm288, %v271, %v283
        %vm293 = vcmask 121856
        %v294 = vsel %vm293, %v265, %v277
        %v295 = vsel %vm293, %v267, %v279
        %v296 = vsel %vm293, %v269, %v281
        %v297 = vsel %vm293, %v271, %v283
        %v298 = vadd.f32 %v289, %v256
        %v299 = vadd.f32 %v290, %v257
        %v300 = vadd.f32 %v291, %v258
        %v301 = vadd.f32 %v292, %v259
        %v302 = vadd.f32 %v298, %v294
        %v303 = vadd.f32 %v299, %v295
        %v304 = vadd.f32 %v300, %v296
        %v305 = vadd.f32 %v301, %v297
        %v308 = vrot.slane %v214, 1
        %v309 = vrot.slane %v216, 1
        %v314 = vrot.slane %v214, 7
        %v315 = vrot.slane %v215, 7
        %v316 = vsel %vm226, %v314, %v315
        %v317 = vrot.slane %v216, 7
        %v318 = vrot.slane %v217, 7
        %v319 = vsel %vm226, %v317, %v318
        %v324 = vsel %vm226, %v308, %v314
        %v325 = vsel %vm226, %v309, %v317
        %v326 = vrot.slane %v215, 1
        %v327 = vsel %vm239, %v308, %v326
        %v328 = vrot.slane %v217, 1
        %v329 = vsel %vm239, %v309, %v328
        %v336 = vsel %vm239, %v326, %v315
        %v337 = vsel %vm239, %v328, %v318
        %v338 = vadd.f32 %v324, %v214
        %v339 = vadd.f32 %v316, %v215
        %v340 = vadd.f32 %v325, %v216
        %v341 = vadd.f32 %v319, %v217
        %v342 = vadd.f32 %v338, %v327
        %v343 = vadd.f32 %v339, %v336
        %v344 = vadd.f32 %v340, %v329
        %v345 = vadd.f32 %v341, %v337
        %350 = vrot.lane.b32.xlu0 %v342, 127
        %v351 = vpop.permute.xlu0 %350
        %352 = vrot.lane.b32.xlu0 %v343, 127
        %v353 = vpop.permute.xlu0 %352
        %354 = vrot.lane.b32.xlu0 %v344, 127
        %v355 = vpop.permute.xlu0 %354
        %356 = vrot.lane.b32.xlu0 %v345, 127
        %v357 = vpop.permute.xlu0 %356
        %362 = vrot.lane.b32.xlu0 %v342, 1
        %v363 = vpop.permute.xlu0 %362
        %364 = vrot.lane.b32.xlu0 %v343, 1
        %v365 = vpop.permute.xlu0 %364
        %366 = vrot.lane.b32.xlu0 %v344, 1
        %v367 = vpop.permute.xlu0 %366
        %368 = vrot.lane.b32.xlu0 %v345, 1
        %v369 = vpop.permute.xlu0 %368
        %v374 = vsel %vm288, %v351, %v363
        %v375 = vsel %vm288, %v353, %v365
        %v376 = vsel %vm288, %v355, %v367
        %v377 = vsel %vm288, %v357, %v369
        %v378 = vsel %vm293, %v351, %v363
        %v379 = vsel %vm293, %v353, %v365
        %v380 = vsel %vm293, %v355, %v367
        %v381 = vsel %vm293, %v357, %v369
        %v382 = vadd.f32 %v374, %v342
        %v383 = vadd.f32 %v375, %v343
        %v384 = vadd.f32 %v376, %v344
        %v385 = vadd.f32 %v377, %v345
        %v386 = vadd.f32 %v382, %v378
        %v387 = vadd.f32 %v383, %v379
        %v388 = vadd.f32 %v384, %v380
        %v389 = vadd.f32 %v385, %v381
        %v390 = vmul.f32 %v210, %v214
        %v391 = vmul.f32 %v211, %v215
        %v392 = vmul.f32 %v212, %v216
        %v393 = vmul.f32 %v213, %v217
        %v396 = vrot.slane %v390, 1
        %v397 = vrot.slane %v392, 1
        %v402 = vrot.slane %v390, 7
        %v403 = vrot.slane %v391, 7
        %v404 = vsel %vm226, %v402, %v403
        %v405 = vrot.slane %v392, 7
        %v406 = vrot.slane %v393, 7
        %v407 = vsel %vm226, %v405, %v406
        %v412 = vsel %vm226, %v396, %v402
        %v413 = vsel %vm226, %v397, %v405
        %v414 = vrot.slane %v391, 1
        %v415 = vsel %vm239, %v396, %v414
        %v416 = vrot.slane %v393, 1
        %v417 = vsel %vm239, %v397, %v416
        %v424 = vsel %vm239, %v414, %v403
        %v425 = vsel %vm239, %v416, %v406
        %v426 = vadd.f32 %v412, %v390
        %v427 = vadd.f32 %v404, %v391
        %v428 = vadd.f32 %v413, %v392
        %v429 = vadd.f32 %v407, %v393
        %v430 = vadd.f32 %v426, %v415
        %v431 = vadd.f32 %v427, %v424
        %v432 = vadd.f32 %v428, %v417
        %v433 = vadd.f32 %v429, %v425
        %438 = vrot.lane.b32.xlu0 %v430, 127
        %v439 = vpop.permute.xlu0 %438
        %440 = vrot.lane.b32.xlu0 %v431, 127
        %v441 = vpop.permute.xlu0 %440
        %442 = vrot.lane.b32.xlu0 %v432, 127
        %v443 = vpop.permute.xlu0 %442
        %444 = vrot.lane.b32.xlu0 %v433, 127
        %v445 = vpop.permute.xlu0 %444
        %450 = vrot.lane.b32.xlu0 %v430, 1
        %v451 = vpop.permute.xlu0 %450
        %452 = vrot.lane.b32.xlu0 %v431, 1
        %v453 = vpop.permute.xlu0 %452
        %454 = vrot.lane.b32.xlu0 %v432, 1
        %v455 = vpop.permute.xlu0 %454
        %456 = vrot.lane.b32.xlu0 %v433, 1
        %v457 = vpop.permute.xlu0 %456
        %v462 = vsel %vm288, %v439, %v451
        %v463 = vsel %vm288, %v441, %v453
        %v464 = vsel %vm288, %v443, %v455
        %v465 = vsel %vm288, %v445, %v457
        %v466 = vsel %vm293, %v439, %v451
        %v467 = vsel %vm293, %v441, %v453
        %v468 = vsel %vm293, %v443, %v455
        %v469 = vsel %vm293, %v445, %v457
        %v470 = vadd.f32 %v462, %v430
        %v471 = vadd.f32 %v463, %v431
        %v472 = vadd.f32 %v464, %v432
        %v473 = vadd.f32 %v465, %v433
        %v474 = vadd.f32 %v470, %v466
        %v475 = vadd.f32 %v471, %v467
        %v476 = vadd.f32 %v472, %v468
        %v477 = vadd.f32 %v473, %v469
        %v478 = vmul.f32 %v210, %v210
        %v479 = vmul.f32 %v211, %v211
        %v480 = vmul.f32 %v212, %v212
        %v481 = vmul.f32 %v213, %v213
        %v482 = vmul.f32 %v214, %v214
        %v483 = vmul.f32 %v215, %v215
        %v484 = vmul.f32 %v216, %v216
        %v485 = vmul.f32 %v217, %v217
        %v486 = vadd.f32 %v478, %v482
        %v487 = vadd.f32 %v479, %v483
        %v488 = vadd.f32 %v480, %v484
        %v489 = vadd.f32 %v481, %v485
        %v492 = vrot.slane %v486, 1
        %v493 = vrot.slane %v488, 1
        %v498 = vrot.slane %v486, 7
        %v499 = vrot.slane %v487, 7
        %v500 = vsel %vm226, %v498, %v499
        %v501 = vrot.slane %v488, 7
        %v502 = vrot.slane %v489, 7
        %v503 = vsel %vm226, %v501, %v502
        %v508 = vsel %vm226, %v492, %v498
        %v509 = vsel %vm226, %v493, %v501
        %v510 = vrot.slane %v487, 1
        %v511 = vsel %vm239, %v492, %v510
        %v512 = vrot.slane %v489, 1
        %v513 = vsel %vm239, %v493, %v512
        %v520 = vsel %vm239, %v510, %v499
        %v521 = vsel %vm239, %v512, %v502
        %v522 = vadd.f32 %v508, %v486
        %v523 = vadd.f32 %v500, %v487
        %v524 = vadd.f32 %v509, %v488
        %v525 = vadd.f32 %v503, %v489
        %v526 = vadd.f32 %v522, %v511
        %v527 = vadd.f32 %v523, %v520
        %v528 = vadd.f32 %v524, %v513
        %v529 = vadd.f32 %v525, %v521
        %534 = vrot.lane.b32.xlu0 %v526, 127
        %v535 = vpop.permute.xlu0 %534
        %536 = vrot.lane.b32.xlu0 %v527, 127
        %v537 = vpop.permute.xlu0 %536
        %538 = vrot.lane.b32.xlu0 %v528, 127
        %v539 = vpop.permute.xlu0 %538
        %540 = vrot.lane.b32.xlu0 %v529, 127
        %v541 = vpop.permute.xlu0 %540
        %546 = vrot.lane.b32.xlu0 %v526, 1
        %v547 = vpop.permute.xlu0 %546
        %548 = vrot.lane.b32.xlu0 %v527, 1
        %v549 = vpop.permute.xlu0 %548
        %550 = vrot.lane.b32.xlu0 %v528, 1
        %v551 = vpop.permute.xlu0 %550
        %552 = vrot.lane.b32.xlu0 %v529, 1
        %v553 = vpop.permute.xlu0 %552
        %v558 = vsel %vm288, %v535, %v547
        %v559 = vsel %vm288, %v537, %v549
        %v560 = vsel %vm288, %v539, %v551
        %v561 = vsel %vm288, %v541, %v553
        %v562 = vsel %vm293, %v535, %v547
        %v563 = vsel %vm293, %v537, %v549
        %v564 = vsel %vm293, %v539, %v551
        %v565 = vsel %vm293, %v541, %v553
        %v566 = vadd.f32 %v558, %v526
        %v567 = vadd.f32 %v559, %v527
        %v568 = vadd.f32 %v560, %v528
        %v569 = vadd.f32 %v561, %v529
        %v570 = vadd.f32 %v566, %v562
        %v571 = vadd.f32 %v567, %v563
        %v572 = vadd.f32 %v568, %v564
        %v573 = vadd.f32 %v569, %v565
        %v574 = vmul.f32 %v302, %v386
        %v575 = vmul.f32 %v303, %v387
        %v576 = vmul.f32 %v304, %v388
        %v577 = vmul.f32 %v305, %v389
        %v578 = vmul.f32 %v302, %v302
        %v579 = vmul.f32 %v303, %v303
        %v580 = vmul.f32 %v304, %v304
        %v581 = vmul.f32 %v305, %v305
        %v582 = vmul.f32 %v386, %v386
        %v583 = vmul.f32 %v387, %v387
        %v584 = vmul.f32 %v388, %v388
        %v585 = vmul.f32 %v389, %v389
        %v586 = vadd.f32 %v578, %v582
        %v587 = vadd.f32 %v579, %v583
        %v588 = vadd.f32 %v580, %v584
        %v589 = vadd.f32 %v581, %v585
        %v590 = vmul.f32 %v574, 2.0
        %v591 = vmul.f32 %v575, 2.0
        %v592 = vmul.f32 %v576, 2.0
        %v593 = vmul.f32 %v577, 2.0
        %v594 = vadd.f32 %v590, 0.0081
        %v595 = vadd.f32 %v591, 0.0081
        %v596 = vadd.f32 %v592, 0.0081
        %v597 = vadd.f32 %v593, 0.0081
        %v598 = vmul.f32 %v474, 18.0
        %v599 = vmul.f32 %v475, 18.0
        %v600 = vmul.f32 %v476, 18.0
        %v601 = vmul.f32 %v477, 18.0
        %v602 = vsub.f32 %v598, %v590
        %v603 = vsub.f32 %v599, %v591
        %v604 = vsub.f32 %v600, %v592
        %v605 = vsub.f32 %v601, %v593
        %v606 = vadd.f32 %v602, 0.0729
        %v607 = vadd.f32 %v603, 0.0729
        %v608 = vadd.f32 %v604, 0.0729
        %v609 = vadd.f32 %v605, 0.0729
        %v610 = vmul.f32 %v594, %v606
        %v611 = vmul.f32 %v595, %v607
        %v612 = vmul.f32 %v596, %v608
        %v613 = vmul.f32 %v597, %v609
        %v614 = vadd.f32 %v586, 0.0081
        %v615 = vadd.f32 %v587, 0.0081
        %v616 = vadd.f32 %v588, 0.0081
        %v617 = vadd.f32 %v589, 0.0081
        %v618 = vmul.f32 %v570, 9.0
        %v619 = vmul.f32 %v571, 9.0
        %v620 = vmul.f32 %v572, 9.0
        %v621 = vmul.f32 %v573, 9.0
        %v622 = vsub.f32 %v618, %v586
        %v623 = vsub.f32 %v619, %v587
        %v624 = vsub.f32 %v620, %v588
        %v625 = vsub.f32 %v621, %v589
        %v626 = vadd.f32 %v622, 0.0729
        %v627 = vadd.f32 %v623, 0.0729
        %v628 = vadd.f32 %v624, 0.0729
        %v629 = vadd.f32 %v625, 0.0729
        %v630 = vmul.f32 %v614, %v626
        %v631 = vmul.f32 %v615, %v627
        %v632 = vmul.f32 %v616, %v628
        %v633 = vmul.f32 %v617, %v629
        %v634 = vrcp.pop %v630
        %v635 = vrcp.pop %v631
        %v636 = vrcp.pop %v632
        %v637 = vrcp.pop %v633
        %v638 = vmul.f32 %v630, %v634
        %v639 = vmul.f32 %v631, %v635
        %v640 = vmul.f32 %v632, %v636
        %v641 = vmul.f32 %v633, %v637
        %v642 = vsub.f32 2.0, %v638
        %v643 = vsub.f32 2.0, %v639
        %v644 = vsub.f32 2.0, %v640
        %v645 = vsub.f32 2.0, %v641
        %v646 = vmul.f32 %v634, %v642
        %v647 = vmul.f32 %v635, %v643
        %v648 = vmul.f32 %v636, %v644
        %v649 = vmul.f32 %v637, %v645
        %v650 = vmul.f32 %v610, %v646
        %v651 = vmul.f32 %v611, %v647
        %v652 = vmul.f32 %v612, %v648
        %v653 = vmul.f32 %v613, %v649
        %v654 = vsub.f32 1.0, %v650
        %v655 = vsub.f32 1.0, %v651
        %v656 = vsub.f32 1.0, %v652
        %v657 = vsub.f32 1.0, %v653
        %v658 = vadd.f32 %v654, 1e-20
        %v659 = vadd.f32 %v655, 1e-20
        %v660 = vadd.f32 %v656, 1e-20
        %v661 = vadd.f32 %v657, 1e-20
        %v662 = vmul.f32 %v658, 0.5
        %v663 = vmul.f32 %v659, 0.5
        %v664 = vmul.f32 %v660, 0.5
        %v665 = vmul.f32 %v661, 0.5
        %v666 = vmax.f32 %v662, 0.0
        %v667 = vmax.f32 %v663, 0.0
        %v668 = vmax.f32 %v664, 0.0
        %v669 = vmax.f32 %v665, 0.0
        %v670 = vmin.f32 %v666, 1.0
        %v671 = vmin.f32 %v667, 1.0
        %v672 = vmin.f32 %v668, 1.0
        %v673 = vmin.f32 %v669, 1.0
        %vm674 = vcmask 130048
        %v675 = vsel %vm674, %v670, 0.0
        %v676 = vsel %vm674, %v671, 0.0
        %v677 = vadd.f32 %v675, %v676
        %v678 = vsel %vm674, %v672, 0.0
        %v679 = vadd.f32 %v677, %v678
        %v680 = vsel %vm674, %v673, 0.0
        %v681 = vadd.f32 %v679, %v680
        %682 = vadd.xlane.f32.xlu0 %v681
        %v683 = vpop.xlane.xlu0 %682
        %v684 = vrot.slane %v683, 4
        %v685 = vadd.f32 %v683, %v684
        %v686 = vrot.slane %v685, 2
        %v687 = vadd.f32 %v685, %v686
        %v688 = vrot.slane %v687, 1
        %v689 = vadd.f32 %v687, %v688
        %s690 = vtos %v689
        %v691 = vstv %s690
        %692 = vst [vmem:[%s207] sm:$0xff] %v691
        %s693 = sand.u32 %s82, 1
        %s694 = scalar_lea.sflag [#allocation4], %s693
        %s695 = sand.u32 %s82, 1
        %s696 = smul.addr %s695, 8
        %s697 = scalar_lea.vmem [#allocation7], %s696
        // Predicated region
        $region37: #{tpu_custom_call.1} parent=27 // pred_check
          %p698 = pneg %p92
        $region38: #{tpu_custom_call.1} parent=27 // pred_check_branch
          %700 = sbr.rel (%p698) target = $region40
        $region39: #{tpu_custom_call.1} parent=27 // pred_region
          %702 = vsyncadd %s694, 0
          %s703 = smul.addr %s22, 8
          %s704 = scalar_lea.hbm %s2, %s703
          %s706 = sshll.u32 %s697, 4
          %s707 = int_to_ptr.vmem [resolvable:$true] %s706
          %s708 = sshll.u32 %s704, 4
          %s709 = int_to_ptr.hbm [resolvable:$true] %s708
          %711 = dma.vmem_to_hbm [thread:$0]  %s707, 128, %s709, %s694
        $region40: #{tpu_custom_call.1} parent=27 // pred_fallthru
          _
      $region28: #{tpu_custom_call.1} parent=5 // pred_fallthru
        _
      %p712 = scmp.le.s32.totalorder 2, %s17
      // Predicated region
      $region41: #{tpu_custom_call.1} parent=5 // pred_check
        %p713 = pneg %p712
      $region42: #{tpu_custom_call.1} parent=5 // pred_check_branch
        %715 = sbr.rel (%p713) target = $region44
      $region43: #{tpu_custom_call.1} parent=5 // pred_region
        %s716 = ssub.s32 %s17, 2
        // Predicated region
        $region45: #{tpu_custom_call.1} parent=43 // pred_check
          %p717 = pneg %p98
        $region46: #{tpu_custom_call.1} parent=43 // pred_check_branch
          %719 = sbr.rel (%p717) target = $region48
        $region47: #{tpu_custom_call.1} parent=43 // pred_region
          %s720 = sand.u32 %s83, 1
          %s721 = scalar_lea.sflag [#allocation4], %s720
          %s722 = sand.u32 %s83, 1
          %s723 = smul.addr %s722, 8
          %s724 = scalar_lea.vmem [#allocation7], %s723
          %726 = dma.done %s721, 128
        $region48: #{tpu_custom_call.1} parent=43 // pred_fallthru
          _
      $region44: #{tpu_custom_call.1} parent=5 // pred_fallthru
        _
    $region6: #{tpu_custom_call.1} parent=1 // loop_footer
      %s21 = sadd.s32 1, %s17
    $region7: #{tpu_custom_call.1} parent=1 // loop_footer_branch
      %16 = sbr.rel target = $region3
    $region8: #{tpu_custom_call.1} parent=1 // loop_exit
      _
    %727 = vsyncpa [#allocation3], 1
    %s728 = scalar_lea.sflag [#allocation3], 1
    %729 = vsyncpa %s728, 1
    %730 = vsyncpa [#allocation6], 1
    %s731 = scalar_lea.sflag [#allocation6], 1
    %732 = vsyncpa %s731, 1
    %733 = vsyncpa [#allocation4], 1
    %s734 = scalar_lea.sflag [#allocation4], 1
    %735 = vsyncpa %s734, 1

</llo_original>
